<compile_context>
chip_gen: v7x
topology: tpu7x:2x2x1
jax: 0.10.0
libtpu: 0.0.40
codegen_flags: <defaults>
</compile_context>

<pallas_src>
import jax
import jax.numpy as jnp
from jax.experimental import pallas as pl
from jax.experimental.pallas import tpu as pltpu

_MIB = 1024 * 1024


def _mc_loss_kernel(v_ref, r_last_ref, w_ref, o_ref):
    # v_ref      : VMEM [bB, S]    value predictions
    # r_last_ref : VMEM [bB, 1]    final-token reward (sliced in wrapper)
    # w_ref      : SMEM [1, 1]     loss weight (f32 scalar)
    # o_ref      : VMEM [bB, S-1]  weight * (v[:, 1:] - r[:, -1:])**2
    w = w_ref[0, 0]
    diff = v_ref[:, 1:].astype(jnp.float32) - r_last_ref[...].astype(jnp.float32)
    o_ref[...] = (w * diff * diff).astype(o_ref.dtype)


def _vmem_budgets() -> tuple[int, int]:
    """(vmem_limit_bytes, io_block_budget_bytes) for the current generation."""
    try:
        cap = int(pltpu.get_tpu_info().vmem_capacity_bytes)
    except Exception:  # pragma: no cover - conservative fallback (v7x-sized)
        cap = 64 * _MIB
    if cap <= 64 * _MIB:
        # v7x: 64 MiB physical VMEM per TensorCore -> stay well inside it.
        return 32 * _MIB, 16 * _MIB
    # v5e / v6e: 128 MiB physical; raise the scoped limit explicitly so the
    # 16/32 MiB defaults don't throttle block size.
    return 48 * _MIB, 24 * _MIB


def _block_plan(batch: int, seq_len: int, itemsize: int,
                block_rows: int | None) -> tuple[int, int]:
    """Pick (block_rows, vmem_limit_bytes) from an explicit VMEM budget."""
    vmem_limit, io_budget = _vmem_budgets()

    # Per-row VMEM bytes: double-buffered v [S], out [S-1], r_last [1] blocks
    # plus ~one extra v-wide block for the relayout copy from v_ref[:, 1:].
    bytes_per_row = itemsize * (2 * (seq_len + (seq_len - 1) + 1) + seq_len)

    if block_rows is None:
        rows = io_budget // max(bytes_per_row, 1)
        rows = max((rows // 16) * 16, 16)          # sublane-pack aligned (f32 & bf16)
        if batch <= rows:
            if batch >= 4 * 16:
                # Budget allows the whole batch in one block: still split into
                # >= 4 grid steps so v7x's two TensorCores both get tiles and
                # DMA overlaps compute on every generation.
                rows = min(rows, ((pl.cdiv(batch, 4) + 15) // 16) * 16)
            elif batch >= 2 * 16:
                rows = min(rows, ((pl.cdiv(batch, 2) + 15) // 16) * 16)
            else:
                rows = batch                       # tiny batch: single full block
    else:
        rows = int(block_rows)

    # Make sure the scoped limit always covers the chosen blocks + headroom
    # for Mosaic internal scratch (guards pathological huge-S cases).
    needed = rows * bytes_per_row
    vmem_limit = max(vmem_limit, needed + 8 * _MIB)
    return rows, int(vmem_limit)


def monte_carlo_loss(v: jax.Array, r: jax.Array, weight=1.0,
                     block_rows: int | None = None) -> jax.Array:
    """Pallas implementation of MonteCarloLoss.forward.

    v, r : [batch, seq_len] float arrays
    returns [batch, seq_len - 1]: weight * (v[:, 1:] - r[:, -1:])**2
    """
    assert v.ndim == 2 and r.ndim == 2, "v and r must be [batch, seq_len]"
    assert v.shape == r.shape, "v and r must share shape"
    batch, seq_len = v.shape
    assert seq_len >= 2, "need seq_len >= 2 to slice v[..., 1:]"

    # Only the final reward column is ever used: slice it in the wrapper so
    # the kernel never DMAs the full r array.
    r_last = jax.lax.slice(r, (0, seq_len - 1), (batch, seq_len))      # [B, 1]
    w = jnp.asarray(weight, dtype=jnp.float32).reshape(1, 1)           # SMEM scalar

    rows, vmem_limit = _block_plan(batch, seq_len,
                                   jnp.dtype(v.dtype).itemsize, block_rows)
    grid = (pl.cdiv(batch, rows),)

    return pl.pallas_call(
        _mc_loss_kernel,
        out_shape=jax.ShapeDtypeStruct((batch, seq_len - 1), v.dtype),
        grid=grid,
        in_specs=[
            # Full seq per block; tile only the batch (sublane) axis.
            pl.BlockSpec((rows, seq_len), lambda i: (i, 0)),
            pl.BlockSpec((rows, 1), lambda i: (i, 0)),
            pl.BlockSpec(memory_space=pltpu.MemorySpace.SMEM),
        ],
        out_specs=pl.BlockSpec((rows, seq_len - 1), lambda i: (i, 0)),
        compiler_params=pltpu.CompilerParams(
            dimension_semantics=("parallel",),
            vmem_limit_bytes=vmem_limit),
    )(v, r_last, w)


def monte_carlo_loss_ref(v, r, weight=1.0):
    """Pure-JAX reference mirroring the PyTorch module."""
    return weight * (v[..., 1:] - r[:, -1][:, None]) ** 2


if __name__ == "__main__":
    key = jax.random.PRNGKey(0)
    kv, kr = jax.random.split(key)

    # Small shapes matching the module's [batch, seq_len] contract.
    batch, seq_len = 2, 8
    v = jax.random.normal(kv, (batch, seq_len), dtype=jnp.float32)
    r = jax.random.normal(kr, (batch, seq_len), dtype=jnp.float32)
    weight = 1.0  # matches torch.tensor(1.0) default

    out = jax.block_until_ready(monte_carlo_loss(v, r, weight))
    ref = monte_carlo_loss_ref(v, r, weight)
    assert out.shape == (batch, seq_len - 1), out.shape
    assert jnp.allclose(out, ref, atol=1e-6, rtol=1e-6), "mismatch vs reference"

    # Exercise the tiled (multi-block, partial tail) path with a forced small
    # block size, still at small overall shapes.
    batch2, seq2 = 40, 8
    kv2, kr2 = jax.random.split(jax.random.PRNGKey(0), 2)
    v2 = jax.random.normal(kv2, (batch2, seq2), dtype=jnp.float32)
    r2 = jax.random.normal(kr2, (batch2, seq2), dtype=jnp.float32)
    out2 = jax.block_until_ready(monte_carlo_loss(v2, r2, 1.0, block_rows=16))
    ref2 = monte_carlo_loss_ref(v2, r2, 1.0)
    assert out2.shape == (batch2, seq2 - 1), out2.shape
    assert jnp.allclose(out2, ref2, atol=1e-6, rtol=1e-6), "tiled path mismatch"

    # Exercise the auto-split (>= 4 grid steps) path, a non-unit SMEM weight,
    # and bf16 inputs.
    batch3, seq3 = 64, 16
    kv3, kr3 = jax.random.split(jax.random.PRNGKey(1), 2)
    v3 = jax.random.normal(kv3, (batch3, seq3), dtype=jnp.bfloat16)
    r3 = jax.random.normal(kr3, (batch3, seq3), dtype=jnp.bfloat16)
    out3 = jax.block_until_ready(monte_carlo_loss(v3, r3, 0.5))
    ref3 = monte_carlo_loss_ref(v3.astype(jnp.float32),
                                r3.astype(jnp.float32), 0.5)
    assert out3.shape == (batch3, seq3 - 1), out3.shape
    assert jnp.allclose(out3.astype(jnp.float32), ref3, atol=2e-2, rtol=2e-2), \
        "auto-split / bf16 path mismatch"

    print("KERNEL_OK")
</pallas_src>

<mosaic_0001>
module attributes {stable_mosaic.version = 11 : i64} {
  func.func @_mc_loss_kernel(%arg0: i32, %arg1: memref<2x8xf32, #tpu.memory_space<vmem>>, %arg2: memref<2x1xf32, #tpu.memory_space<vmem>>, %arg3: memref<1x1xf32, #tpu.memory_space<smem>>, %arg4: memref<2x7xf32, #tpu.memory_space<vmem>>) attributes {dimension_semantics = [#tpu.dimension_semantics<parallel>], iteration_bounds = array<i64: 1>, scalar_prefetch = 0 : i64, scratch_operands = 0 : i64, tpu.core_type = #tpu.core_type<tc>, window_params = [{transform_indices = @transform_0, window_bounds = array<i64: 2, 8>}, {transform_indices = @transform_1, window_bounds = array<i64: 2, 1>}, {transform_indices = @transform_2, window_bounds = array<i64: 1, 1>}, {transform_indices = @transform_3, window_bounds = array<i64: 2, 7>}]} {
    %c0 = arith.constant 0 : index
    %c0_0 = arith.constant 0 : index
    %0 = memref.load %arg3[%c0, %c0_0] : memref<1x1xf32, #tpu.memory_space<smem>>
    %c0_1 = arith.constant 0 : index
    %c1 = arith.constant 1 : index
    %1 = vector.load %arg1[%c0_1, %c1] : memref<2x8xf32, #tpu.memory_space<vmem>>, vector<2x7xf32>
    %c0_2 = arith.constant 0 : index
    %c0_3 = arith.constant 0 : index
    %2 = vector.load %arg2[%c0_2, %c0_3] : memref<2x1xf32, #tpu.memory_space<vmem>>, vector<2x1xf32>
    %3 = vector.broadcast %2 : vector<2x1xf32> to vector<2x7xf32>
    %4 = arith.subf %1, %3 : vector<2x7xf32>
    %5 = vector.broadcast %0 : f32 to vector<2x7xf32>
    %6 = arith.mulf %5, %4 : vector<2x7xf32>
    %7 = arith.mulf %6, %4 : vector<2x7xf32>
    %c0_4 = arith.constant 0 : index
    %c0_5 = arith.constant 0 : index
    %8 = vector.load %arg4[%c0_4, %c0_5] : memref<2x7xf32, #tpu.memory_space<vmem>>, vector<2x7xf32>
    tpu.vector_store %arg4[%c0_4, %c0_5], %7 {strides = array<i32>} : memref<2x7xf32, #tpu.memory_space<vmem>>, vector<2x7xf32>,
    return
  }
  func.func @transform_0(%arg0: i32) -> (i32, i32) {
    %c0_i32 = arith.constant 0 : i32
    %c0_i32_0 = arith.constant 0 : i32
    return %arg0, %c0_i32 : i32, i32
  }
  func.func @transform_1(%arg0: i32) -> (i32, i32) {
    %c0_i32 = arith.constant 0 : i32
    %c0_i32_0 = arith.constant 0 : i32
    return %arg0, %c0_i32 : i32, i32
  }
  func.func @transform_2(%arg0: i32) -> (i32, i32) {
    %c0_i32 = arith.constant 0 : i32
    %c0_i32_0 = arith.constant 0 : i32
    %c0_i32_1 = arith.constant 0 : i32
    return %c0_i32, %c0_i32_0 : i32, i32
  }
  func.func @transform_3(%arg0: i32) -> (i32, i32) {
    %c0_i32 = arith.constant 0 : i32
    %c0_i32_0 = arith.constant 0 : i32
    return %arg0, %c0_i32 : i32, i32
  }
}

</mosaic_0001>

<llo_original>
// kernel: tpu_custom_call.1
$region0: #{tpu_custom_call.1}
  #allocation0 [shape = 'u32[]', space=smem, size = 0x4, offset = 0x4, fixed_abs, tag = 'smem constant byte address 0x4 - core index']
  #allocation1 [shape = 'u32[144,128]{1,0:T(1,128)}', space=vmem, size = 0x12000, scoped, tag = 'internal scratch']
  #allocation2 [shape = 'f32[1,1]{1,0:T(1,128)S(6)}', space=smem, size = 0x200, scoped, tag = 'scoped memory for tpu_custom_call.1']
  %s0 = inlined_call_operand.vmem [shape: f32[2,8], index: 0, kind: input, shape index: {}]
  %s1 = inlined_call_operand.vmem [shape: f32[2,1], index: 1, kind: input, shape index: {}]
  %s2 = inlined_call_operand.<no memory space> [shape: f32[1,1], index: 2, kind: input, shape index: {}]
  %s3 = inlined_call_operand.hbm [shape: f32[2,7], index: 3, kind: output, shape index: {}]
  %s4 = sld [smem:[#allocation0]]
  $region22: #{tpu_custom_call.1} parent=0
    _
  %s6 = ssub.s32 1, %s4
  %s7 = scalar_select 0, %s6, %s4
  %8 = sst [smem:[#allocation2]] %s2
  $region1: #{tpu_custom_call.1} parent=0
    #allocation3 [shape = 'u8[1024]{0}', space=vmem, size = 0x400, scoped, tag = 'output window, operand 0, single buffered']
    #allocation4 [shape = 's32[1]{0}', space=sflag, size = 0x4, scoped, tag = 'scoped memory for tpu_custom_call.1']
    %9 = vsyncpa [#allocation4], 0
    // Predicated region
    $region2: #{tpu_custom_call.1} parent=1 // pred_check
      _
    $region3: #{tpu_custom_call.1} parent=1 // pred_check_branch
      %11 = sbr.rel (0) target = $region5
    $region4: #{tpu_custom_call.1} parent=1 // pred_region
      _
    $region5: #{tpu_custom_call.1} parent=1 // pred_fallthru
      _
    // Predicated region
    $region6: #{tpu_custom_call.1} parent=1 // pred_check
      _
    $region7: #{tpu_custom_call.1} parent=1 // pred_check_branch
      %13 = sbr.rel (0) target = $region9
    $region8: #{tpu_custom_call.1} parent=1 // pred_region
      _
    $region9: #{tpu_custom_call.1} parent=1 // pred_fallthru
      _
    // Predicated region
    $region10: #{tpu_custom_call.1} parent=1 // pred_check
      _
    $region11: #{tpu_custom_call.1} parent=1 // pred_check_branch
      %15 = sbr.rel (0) target = $region13
    $region12: #{tpu_custom_call.1} parent=1 // pred_region
      _
    $region13: #{tpu_custom_call.1} parent=1 // pred_fallthru
      _
    %s16 = sld [smem:[#allocation2]]
    %v17 = vld [vmem:[%s0] sm:$0x3]
    %v18 = vld [vmem:[%s1] sm:$0x3]
    %20 = vset.pattern.permute.xlu0 0
    %21 = vperm.xlu0 %20, %v18
    %v22 = vpop.permute.xlu0 %21
    %v24 = vsub.f32 %v17, %v22
    %v25 = vstv %s16
    %v26 = vmul.f32 %v25, %v24
    %v27 = vmul.f32 %v26, %v24
    %29 = vrot.lane.b32.xlu0 %v27, 127
    %v30 = vpop.permute.xlu0 %29
    %vm32 = vcmask 50176
    %33 = vst.msk [vmem:[#allocation3] sm:$0x3] %vm32, %v30
    // Predicated region
    $region14: #{tpu_custom_call.1} parent=1 // pred_check
      _
    $region15: #{tpu_custom_call.1} parent=1 // pred_check_branch
      %35 = sbr.rel (0) target = $region17
    $region16: #{tpu_custom_call.1} parent=1 // pred_region
      %s37 = ssub.s32 32, 32
      %38 = vsyncadd [#allocation4], %s37
      %s40 = sshll.u32 [#allocation3], 4
      %s41 = int_to_ptr.vmem [resolvable:$true] %s40
      %43 = dma.vmem_to_hbm [thread:$0]  %s41, 32, %s3, [#allocation4]
    $region17: #{tpu_custom_call.1} parent=1 // pred_fallthru
      _
    // Predicated region
    $region18: #{tpu_custom_call.1} parent=1 // pred_check
      _
    $region19: #{tpu_custom_call.1} parent=1 // pred_check_branch
      %45 = sbr.rel (0) target = $region21
    $region20: #{tpu_custom_call.1} parent=1 // pred_region
      %46 = dma.done [#allocation4], 32
    $region21: #{tpu_custom_call.1} parent=1 // pred_fallthru
      _
    %47 = vsyncpa [#allocation4], 1

</llo_original>
